<compile_context>
chip_gen: v7x
topology: tpu7x:2x2x1
jax: 0.10.0
libtpu: 0.0.40
codegen_flags: <defaults>
</compile_context>

<pallas_src>
import functools

import jax
import jax.numpy as jnp
from jax.experimental import pallas as pl
from jax.experimental.pallas import tpu as pltpu

LANES = 128


def _is_pow2(n):
    return n > 0 and (n & (n - 1)) == 0


def _fold_rows(a, racc):
    """(C, r, L) -> (C, racc, L) via pairwise sublane-tile-aligned adds (VPU)."""
    r = a.shape[1]
    while r > racc:
        half = r // 2
        a = a[:, :half, :] + a[:, half:, :]
        r = half
    return a


def _tvmf_partial_kernel(x_ref, lab_ref, out_ref,
                         ss_acc, st_acc, tt_acc,
                         *, apply_softmax, n_valid, tile_rows,
                         tiles_per_split, full_tiles, any_masked, racc):
    p = pl.program_id(1)
    j = pl.program_id(2)

    @pl.when(j == 0)
    def _():
        ss_acc[...] = jnp.zeros_like(ss_acc)
        st_acc[...] = jnp.zeros_like(st_acc)
        tt_acc[...] = jnp.zeros_like(tt_acc)

    def _accumulate(masked):
        x = x_ref[...].astype(jnp.float32)               # (C, R, 128)
        C, R, L = x.shape
        lab = lab_ref[...].astype(jnp.int32)             # (R, 128)

        if masked:
            gt = p * tiles_per_split + j                 # global tile index
            row = jax.lax.broadcasted_iota(jnp.int32, (R, L), 0)
            lane = jax.lax.broadcasted_iota(jnp.int32, (R, L), 1)
            idx = gt * (tile_rows * LANES) + row * L + lane
            valid = idx < n_valid                        # (R, 128) bool
            valid3 = valid[None, :, :]
            # Keep garbage / padded lanes finite before exp.
            x = jnp.where(valid3, x, 0.0)

        if apply_softmax:
            # Class-dim reductions are over the leading slab axis -> pure VPU.
            m = jnp.max(x, axis=0, keepdims=True)        # (1, R, L)
            e = jnp.exp(x - m)                           # EUP
            denom = jnp.sum(e, axis=0, keepdims=True)    # (1, R, L)
            s = e * pl.reciprocal(denom, approx=True)    # EUP recip + C muls
        else:
            s = x

        cls = jax.lax.broadcasted_iota(jnp.int32, (C, R, L), 0)
        eq = cls == lab[None, :, :]                      # one-hot predicate
        if masked:
            s = jnp.where(valid3, s, 0.0)
            eq = jnp.logical_and(eq, valid3)

        # Per-step reduce along the sublane axis into small accumulators:
        # the only VMEM RMW per step is (C, racc, 128).
        ss_acc[...] += _fold_rows(s * s, racc)
        st_acc[...] += _fold_rows(jnp.where(eq, s, 0.0), racc)
        tt_acc[...] += _fold_rows(jnp.where(eq, 1.0, 0.0), racc)

    if any_masked:
        gt = p * tiles_per_split + j

        @pl.when(gt >= full_tiles)        # only ragged / overhang tiles
        def _():
            _accumulate(True)

        @pl.when(gt < full_tiles)         # interior tiles: no mask work
        def _():
            _accumulate(False)
    else:
        _accumulate(False)

    @pl.when(j == pl.num_programs(2) - 1)
    def _():
        def _reduce(a):                   # (C, racc, 128) -> (C, 1)  (XLU once)
            return jnp.sum(jnp.sum(a, axis=2), axis=1, keepdims=True)
        out_ref[:, 0:1] = _reduce(ss_acc[...])   # sum score^2
        out_ref[:, 1:2] = _reduce(st_acc[...])   # sum score*target
        out_ref[:, 2:3] = _reduce(tt_acc[...])   # sum target (== target^2)


def adaptive_tvmf_dice_loss(inputs, target, kappa, softmax=True,
                            rows_per_tile=None, parallel_splits=None):
    """inputs: (B, C, H, W) float logits, target: (B, H, W) int, kappa: (C,)."""
    B, C, H, W = inputs.shape
    HW = H * W

    rows = -(-HW // LANES)                       # ceil(HW / 128)
    HW_pad = rows * LANES

    # Layout glue: free reshapes only; pad at most to the next multiple of 128.
    x = inputs.reshape(B, C, HW)
    lab = target.reshape(B, HW)
    if HW_pad != HW:
        x = jnp.pad(x, ((0, 0), (0, 0), (0, HW_pad - HW)))
        lab = jnp.pad(lab, ((0, 0), (0, HW_pad - HW)))

    x_bytes = x.dtype.itemsize
    if rows_per_tile is None:
        # Largest power-of-two multiple of 8 such that the logits block is
        # ~<= 2 MiB (capped at 512 rows).
        r = 8
        while r < 512 and C * (2 * r) * LANES * x_bytes <= (2 << 20):
            r *= 2
        rows_per_tile = r

    if rows <= rows_per_tile:
        R = rows                                  # block == full dim (legal)
    else:
        R = rows_per_tile
        assert R % 8 == 0 and _is_pow2(R // 8), \
            "rows_per_tile must be 8 * 2^k"

    # Accumulator depth: fold to 8 sublanes when the tile allows it.
    racc = 8 if (R % 8 == 0 and _is_pow2(R // 8)) else R

    nblocks = -(-rows // R)                       # row-blocks present in HBM
    if parallel_splits is None:
        # Split the tile loop for v7x's 2 TensorCores, but only when the
        # (at most one) duplicated fully-masked tile is cheap.
        parallel_splits = 2 if (nblocks >= 2 and
                                (nblocks % 2 == 0 or nblocks >= 16)) else 1
    splits = parallel_splits
    tiles_per_split = -(-nblocks // splits)
    full_tiles = HW // (R * LANES)                # tiles fully inside HW
    any_masked = full_tiles < splits * tiles_per_split

    # Small label dtype when safe (int8 sublane tile is 32).
    use_i8 = (C <= 127) and (nblocks == 1 or R % 32 == 0)
    lab = lab.astype(jnp.int8 if use_i8 else jnp.int32)

    x = x.reshape(B, C, rows, LANES)
    lab = lab.reshape(B, rows, LANES)

    # VMEM budget (explicit so large tiles work on v5e's 16 MiB scoped default
    # and stay inside v7x's 64 MiB physical VMEM).
    logits_block = C * R * LANES * x_bytes
    label_block = R * LANES * lab.dtype.itemsize
    acc_bytes = 3 * C * racc * LANES * 4
    needed = 2 * (logits_block + label_block) + acc_bytes + (1 << 20)
    vmem_limit = int(min(max(needed + (4 << 20), 16 << 20), 48 << 20))
    vmem_limit = max(vmem_limit, needed)

    kernel = functools.partial(
        _tvmf_partial_kernel,
        apply_softmax=softmax,
        n_valid=HW,
        tile_rows=R,
        tiles_per_split=tiles_per_split,
        full_tiles=full_tiles,
        any_masked=any_masked,
        racc=racc,
    )

    def _row_block(b, p, j):
        # Clamp so duplicated (fully-masked) logical tiles never DMA OOB.
        return jnp.minimum(p * tiles_per_split + j, nblocks - 1)

    partials = pl.pallas_call(
        kernel,
        out_shape=jax.ShapeDtypeStruct((B, splits, C, 3), jnp.float32),
        grid_spec=pltpu.PrefetchScalarGridSpec(
            num_scalar_prefetch=0,
            grid=(B, splits, tiles_per_split),
            in_specs=[
                # logits tile: (C, R, 128), classes on the leading slab axis
                pl.BlockSpec((None, C, R, LANES),
                             lambda b, p, j: (b, 0, _row_block(b, p, j), 0)),
                # labels tile: (R, 128)
                pl.BlockSpec((None, R, LANES),
                             lambda b, p, j: (b, _row_block(b, p, j), 0)),
            ],
            # per-(batch, split) partial sums, written once in the epilogue
            out_specs=pl.BlockSpec((None, None, C, 3),
                                   lambda b, p, j: (b, p, 0, 0)),
            scratch_shapes=[
                pltpu.VMEM((C, racc, LANES), jnp.float32),   # sum score^2
                pltpu.VMEM((C, racc, LANES), jnp.float32),   # sum score*target
                pltpu.VMEM((C, racc, LANES), jnp.float32),   # sum target
            ],
        ),
        compiler_params=pltpu.CompilerParams(
            dimension_semantics=("parallel", "parallel", "arbitrary"),
            vmem_limit_bytes=vmem_limit),
    )(x, lab)

    # Tiny per-class epilogue in plain JAX (C scalars): combines partials
    # across batches and splits, applies the kappa formula exactly as the
    # PyTorch module does (F.normalize eps clamp = 1e-12).
    ss = jnp.sum(partials[..., 0], axis=(0, 1))
    st = jnp.sum(partials[..., 1], axis=(0, 1))
    tt = jnp.sum(partials[..., 2], axis=(0, 1))
    eps = jnp.float32(1e-12)
    cosine = st / (jnp.maximum(jnp.sqrt(ss), eps) * jnp.maximum(jnp.sqrt(tt), eps))
    kap = kappa.astype(jnp.float32)
    intersect = (1.0 + cosine) / (1.0 + (1.0 - cosine) * kap) - 1.0
    loss = jnp.square(1.0 - intersect)
    return jnp.mean(loss)


def _reference_loss(inputs, target, kappa):
    """Pure-JAX re-implementation of the PyTorch module for validation."""
    C = inputs.shape[1]
    probs = jax.nn.softmax(inputs.astype(jnp.float32), axis=1)
    onehot = jax.nn.one_hot(target, C, axis=1, dtype=jnp.float32)
    total = jnp.float32(0.0)
    for i in range(C):
        s = probs[:, i]
        t = onehot[:, i]
        sn = s / jnp.maximum(jnp.sqrt(jnp.sum(s * s)), 1e-12)
        tn = t / jnp.maximum(jnp.sqrt(jnp.sum(t * t)), 1e-12)
        cos = jnp.sum(sn * tn)
        inter = (1.0 + cos) / (1.0 + (1.0 - cos) * kappa[i]) - 1.0
        total = total + (1.0 - inter) ** 2.0
    return total / C


if __name__ == "__main__":
    B, C, H, W = 2, 4, 16, 16
    key = jax.random.PRNGKey(0)
    k1, k2 = jax.random.split(key)

    inputs = jax.random.normal(k1, (B, C, H, W), dtype=jnp.float32)
    target = jax.random.randint(k2, (B, H, W), 0, C, dtype=jnp.int32)
    # Deterministic kappa per class (forward-pass argument, not a learned param).
    kappa = jnp.arange(1, C + 1, dtype=jnp.float32)

    loss = adaptive_tvmf_dice_loss(inputs, target, kappa, softmax=True)
    loss = jax.block_until_ready(loss)

    ref = jax.block_until_ready(_reference_loss(inputs, target, kappa))
    # Tolerance loosened slightly because the softmax uses the EUP approx
    # reciprocal (pl.reciprocal(approx=True)).
    assert jnp.allclose(loss, ref, rtol=2e-3, atol=1e-4), (loss, ref)

    print("KERNEL_OK")
</pallas_src>

<mosaic_0001>
module attributes {stable_mosaic.version = 11 : i64} {
  func.func @_tvmf_partial_kernel(%arg0: i32, %arg1: i32, %arg2: i32, %arg3: memref<1x4x2x128xf32, #tpu.memory_space<vmem>>, %arg4: memref<1x2x128xi8, #tpu.memory_space<vmem>>, %arg5: memref<1x1x4x3xf32, #tpu.memory_space<vmem>>, %arg6: memref<4x2x128xf32, #tpu.memory_space<vmem>>, %arg7: memref<4x2x128xf32, #tpu.memory_space<vmem>>, %arg8: memref<4x2x128xf32, #tpu.memory_space<vmem>>) attributes {dimension_semantics = [#tpu.dimension_semantics<parallel>, #tpu.dimension_semantics<parallel>, #tpu.dimension_semantics<arbitrary>], iteration_bounds = array<i64: 2, 1, 1>, scalar_prefetch = 0 : i64, scratch_operands = 3 : i64, tpu.core_type = #tpu.core_type<tc>, window_params = [{transform_indices = @transform_0, window_bounds = array<i64: 1, 4, 2, 128>}, {transform_indices = @transform_1, window_bounds = array<i64: 1, 2, 128>}, {transform_indices = @transform_2, window_bounds = array<i64: 1, 1, 4, 3>}]} {
    %c0_i32 = arith.constant 0 : i32
    %0 = arith.cmpi eq, %arg2, %c0_i32 : i32
    %1 = arith.extui %0 : i1 to i32
    %c0_i32_0 = arith.constant 0 : i32
    %2 = arith.cmpi ne, %1, %c0_i32_0 : i32
    scf.if %2 {
      %cst_31 = arith.constant 0.000000e+00 : f32
      %40 = vector.broadcast %cst_31 : f32 to vector<4x2x128xf32>
      %c0_32 = arith.constant 0 : index
      %c0_33 = arith.constant 0 : index
      %c0_34 = arith.constant 0 : index
      %41 = vector.load %arg6[%c0_32, %c0_33, %c0_34] : memref<4x2x128xf32, #tpu.memory_space<vmem>>, vector<4x2x128xf32>
      tpu.vector_store %arg6[%c0_32, %c0_33, %c0_34], %40 {strides = array<i32>} : memref<4x2x128xf32, #tpu.memory_space<vmem>>, vector<4x2x128xf32>,
      %cst_35 = arith.constant 0.000000e+00 : f32
      %42 = vector.broadcast %cst_35 : f32 to vector<4x2x128xf32>
      %c0_36 = arith.constant 0 : index
      %c0_37 = arith.constant 0 : index
      %c0_38 = arith.constant 0 : index
      %43 = vector.load %arg7[%c0_36, %c0_37, %c0_38] : memref<4x2x128xf32, #tpu.memory_space<vmem>>, vector<4x2x128xf32>
      tpu.vector_store %arg7[%c0_36, %c0_37, %c0_38], %42 {strides = array<i32>} : memref<4x2x128xf32, #tpu.memory_space<vmem>>, vector<4x2x128xf32>,
      %cst_39 = arith.constant 0.000000e+00 : f32
      %44 = vector.broadcast %cst_39 : f32 to vector<4x2x128xf32>
      %c0_40 = arith.constant 0 : index
      %c0_41 = arith.constant 0 : index
      %c0_42 = arith.constant 0 : index
      %45 = vector.load %arg8[%c0_40, %c0_41, %c0_42] : memref<4x2x128xf32, #tpu.memory_space<vmem>>, vector<4x2x128xf32>
      tpu.vector_store %arg8[%c0_40, %c0_41, %c0_42], %44 {strides = array<i32>} : memref<4x2x128xf32, #tpu.memory_space<vmem>>, vector<4x2x128xf32>,
    } else {
    }
    %c0 = arith.constant 0 : index
    %c0_1 = arith.constant 0 : index
    %c0_2 = arith.constant 0 : index
    %c0_3 = arith.constant 0 : index
    %3 = vector.load %arg3[%c0, %c0_1, %c0_2, %c0_3] : memref<1x4x2x128xf32, #tpu.memory_space<vmem>>, vector<1x4x2x128xf32>
    %4 = vector.shape_cast %3 : vector<1x4x2x128xf32> to vector<4x2x128xf32>
    %c0_4 = arith.constant 0 : index
    %c0_5 = arith.constant 0 : index
    %c0_6 = arith.constant 0 : index
    %5 = vector.load %arg4[%c0_4, %c0_5, %c0_6] : memref<1x2x128xi8, #tpu.memory_space<vmem>>, vector<1x2x128xi8>
    %6 = vector.shape_cast %5 : vector<1x2x128xi8> to vector<2x128xi8>
    %7 = arith.extsi %6 : vector<2x128xi8> to vector<2x128xi32>
    %cst = arith.constant dense<0xFF800000> : vector<2x128xf32>
    %8 = vector.multi_reduction <maximumf>, %4, %cst [0] : vector<4x2x128xf32> to vector<2x128xf32>
    %9 = vector.shape_cast %8 : vector<2x128xf32> to vector<1x2x128xf32>
    %10 = vector.broadcast %9 : vector<1x2x128xf32> to vector<4x2x128xf32>
    %11 = arith.subf %4, %10 : vector<4x2x128xf32>
    %12 = math.exp %11 : vector<4x2x128xf32>
    %cst_7 = arith.constant dense<0.000000e+00> : vector<2x128xf32>
    %13 = vector.multi_reduction <add>, %12, %cst_7 [0] : vector<4x2x128xf32> to vector<2x128xf32>
    %14 = vector.shape_cast %13 : vector<2x128xf32> to vector<1x2x128xf32>
    %15 = tpu.reciprocal %14 {approx = true} : vector<1x2x128xf32> -> vector<1x2x128xf32>
    %16 = vector.broadcast %15 : vector<1x2x128xf32> to vector<4x2x128xf32>
    %17 = arith.mulf %12, %16 : vector<4x2x128xf32>
    %18 = tpu.iota {dimensions = array<i32: 0>} : vector<4x2x128xi32>
    %19 = vector.shape_cast %7 : vector<2x128xi32> to vector<1x2x128xi32>
    %20 = vector.broadcast %19 : vector<1x2x128xi32> to vector<4x2x128xi32>
    %21 = arith.cmpi eq, %18, %20 : vector<4x2x128xi32>
    %c0_8 = arith.constant 0 : index
    %c0_9 = arith.constant 0 : index
    %c0_10 = arith.constant 0 : index
    %22 = vector.load %arg6[%c0_8, %c0_9, %c0_10] : memref<4x2x128xf32, #tpu.memory_space<vmem>>, vector<4x2x128xf32>
    %23 = arith.mulf %17, %17 : vector<4x2x128xf32>
    %24 = arith.addf %22, %23 : vector<4x2x128xf32>
    %c0_11 = arith.constant 0 : index
    %c0_12 = arith.constant 0 : index
    %c0_13 = arith.constant 0 : index
    %25 = vector.load %arg6[%c0_11, %c0_12, %c0_13] : memref<4x2x128xf32, #tpu.memory_space<vmem>>, vector<4x2x128xf32>
    tpu.vector_store %arg6[%c0_11, %c0_12, %c0_13], %24 {strides = array<i32>} : memref<4x2x128xf32, #tpu.memory_space<vmem>>, vector<4x2x128xf32>,
    %c0_14 = arith.constant 0 : index
    %c0_15 = arith.constant 0 : index
    %c0_16 = arith.constant 0 : index
    %26 = vector.load %arg7[%c0_14, %c0_15, %c0_16] : memref<4x2x128xf32, #tpu.memory_space<vmem>>, vector<4x2x128xf32>
    %cst_17 = arith.constant 0.000000e+00 : f32
    %27 = vector.broadcast %cst_17 : f32 to vector<4x2x128xf32>
    %28 = arith.select %21, %17, %27 : vector<4x2x128xi1>, vector<4x2x128xf32>
    %29 = arith.addf %26, %28 : vector<4x2x128xf32>
    %c0_18 = arith.constant 0 : index
    %c0_19 = arith.constant 0 : index
    %c0_20 = arith.constant 0 : index
    %30 = vector.load %arg7[%c0_18, %c0_19, %c0_20] : memref<4x2x128xf32, #tpu.memory_space<vmem>>, vector<4x2x128xf32>
    tpu.vector_store %arg7[%c0_18, %c0_19, %c0_20], %29 {strides = array<i32>} : memref<4x2x128xf32, #tpu.memory_space<vmem>>, vector<4x2x128xf32>,
    %c0_21 = arith.constant 0 : index
    %c0_22 = arith.constant 0 : index
    %c0_23 = arith.constant 0 : index
    %31 = vector.load %arg8[%c0_21, %c0_22, %c0_23] : memref<4x2x128xf32, #tpu.memory_space<vmem>>, vector<4x2x128xf32>
    %cst_24 = arith.constant 1.000000e+00 : f32
    %cst_25 = arith.constant 0.000000e+00 : f32
    %32 = vector.broadcast %cst_24 : f32 to vector<4x2x128xf32>
    %33 = vector.broadcast %cst_25 : f32 to vector<4x2x128xf32>
    %34 = arith.select %21, %32, %33 : vector<4x2x128xi1>, vector<4x2x128xf32>
    %35 = arith.addf %31, %34 : vector<4x2x128xf32>
    %c0_26 = arith.constant 0 : index
    %c0_27 = arith.constant 0 : index
    %c0_28 = arith.constant 0 : index
    %36 = vector.load %arg8[%c0_26, %c0_27, %c0_28] : memref<4x2x128xf32, #tpu.memory_space<vmem>>, vector<4x2x128xf32>
    tpu.vector_store %arg8[%c0_26, %c0_27, %c0_28], %35 {strides = array<i32>} : memref<4x2x128xf32, #tpu.memory_space<vmem>>, vector<4x2x128xf32>,
    %c0_i32_29 = arith.constant 0 : i32
    %37 = arith.cmpi eq, %arg2, %c0_i32_29 : i32
    %38 = arith.extui %37 : i1 to i32
    %c0_i32_30 = arith.constant 0 : i32
    %39 = arith.cmpi ne, %38, %c0_i32_30 : i32
    scf.if %39 {
      %c0_31 = arith.constant 0 : index
      %c0_32 = arith.constant 0 : index
      %c0_33 = arith.constant 0 : index
      %40 = vector.load %arg6[%c0_31, %c0_32, %c0_33] : memref<4x2x128xf32, #tpu.memory_space<vmem>>, vector<4x2x128xf32>
      %cst_34 = arith.constant dense<0.000000e+00> : vector<4x2xf32>
      %41 = vector.multi_reduction <add>, %40, %cst_34 [2] : vector<4x2x128xf32> to vector<4x2xf32>
      %cst_35 = arith.constant dense<0.000000e+00> : vector<4xf32>
      %42 = vector.multi_reduction <add>, %41, %cst_35 [1] : vector<4x2xf32> to vector<4xf32>
      %43 = vector.shape_cast %42 : vector<4xf32> to vector<4x1xf32>
      %c0_36 = arith.constant 0 : index
      %c0_37 = arith.constant 0 : index
      %c0_38 = arith.constant 0 : index
      %c0_39 = arith.constant 0 : index
      %44 = vector.load %arg5[%c0_36, %c0_37, %c0_38, %c0_39] : memref<1x1x4x3xf32, #tpu.memory_space<vmem>>, vector<1x1x4x1xf32>
      %45 = vector.shape_cast %44 : vector<1x1x4x1xf32> to vector<4x1xf32>
      %46 = vector.shape_cast %43 : vector<4x1xf32> to vector<1x1x4x1xf32>
      tpu.vector_store %arg5[%c0_36, %c0_37, %c0_38, %c0_39], %46 {strides = array<i32>} : memref<1x1x4x3xf32, #tpu.memory_space<vmem>>, vector<1x1x4x1xf32>,
      %c0_40 = arith.constant 0 : index
      %c0_41 = arith.constant 0 : index
      %c0_42 = arith.constant 0 : index
      %47 = vector.load %arg7[%c0_40, %c0_41, %c0_42] : memref<4x2x128xf32, #tpu.memory_space<vmem>>, vector<4x2x128xf32>
      %cst_43 = arith.constant dense<0.000000e+00> : vector<4x2xf32>
      %48 = vector.multi_reduction <add>, %47, %cst_43 [2] : vector<4x2x128xf32> to vector<4x2xf32>
      %cst_44 = arith.constant dense<0.000000e+00> : vector<4xf32>
      %49 = vector.multi_reduction <add>, %48, %cst_44 [1] : vector<4x2xf32> to vector<4xf32>
      %50 = vector.shape_cast %49 : vector<4xf32> to vector<4x1xf32>
      %c0_45 = arith.constant 0 : index
      %c0_46 = arith.constant 0 : index
      %c0_47 = arith.constant 0 : index
      %c1 = arith.constant 1 : index
      %51 = vector.load %arg5[%c0_45, %c0_46, %c0_47, %c1] : memref<1x1x4x3xf32, #tpu.memory_space<vmem>>, vector<1x1x4x1xf32>
      %52 = vector.shape_cast %51 : vector<1x1x4x1xf32> to vector<4x1xf32>
      %53 = vector.shape_cast %50 : vector<4x1xf32> to vector<1x1x4x1xf32>
      tpu.vector_store %arg5[%c0_45, %c0_46, %c0_47, %c1], %53 {strides = array<i32>} : memref<1x1x4x3xf32, #tpu.memory_space<vmem>>, vector<1x1x4x1xf32>,
      %c0_48 = arith.constant 0 : index
      %c0_49 = arith.constant 0 : index
      %c0_50 = arith.constant 0 : index
      %54 = vector.load %arg8[%c0_48, %c0_49, %c0_50] : memref<4x2x128xf32, #tpu.memory_space<vmem>>, vector<4x2x128xf32>
      %cst_51 = arith.constant dense<0.000000e+00> : vector<4x2xf32>
      %55 = vector.multi_reduction <add>, %54, %cst_51 [2] : vector<4x2x128xf32> to vector<4x2xf32>
      %cst_52 = arith.constant dense<0.000000e+00> : vector<4xf32>
      %56 = vector.multi_reduction <add>, %55, %cst_52 [1] : vector<4x2xf32> to vector<4xf32>
      %57 = vector.shape_cast %56 : vector<4xf32> to vector<4x1xf32>
      %c0_53 = arith.constant 0 : index
      %c0_54 = arith.constant 0 : index
      %c0_55 = arith.constant 0 : index
      %c2 = arith.constant 2 : index
      %58 = vector.load %arg5[%c0_53, %c0_54, %c0_55, %c2] : memref<1x1x4x3xf32, #tpu.memory_space<vmem>>, vector<1x1x4x1xf32>
      %59 = vector.shape_cast %58 : vector<1x1x4x1xf32> to vector<4x1xf32>
      %60 = vector.shape_cast %57 : vector<4x1xf32> to vector<1x1x4x1xf32>
      tpu.vector_store %arg5[%c0_53, %c0_54, %c0_55, %c2], %60 {strides = array<i32>} : memref<1x1x4x3xf32, #tpu.memory_space<vmem>>, vector<1x1x4x1xf32>,
    } else {
    }
    return
  }
  func.func @transform_0(%arg0: i32, %arg1: i32, %arg2: i32) -> (i32, i32, i32, i32) {
    %c1_i32 = arith.constant 1 : i32
    %0 = arith.muli %arg1, %c1_i32 : i32
    %1 = arith.addi %0, %arg2 : i32
    %c0_i32 = arith.constant 0 : i32
    %2 = arith.minsi %1, %c0_i32 : i32
    %c0_i32_0 = arith.constant 0 : i32
    %c0_i32_1 = arith.constant 0 : i32
    %c0_i32_2 = arith.constant 0 : i32
    return %arg0, %c0_i32_0, %2, %c0_i32_1 : i32, i32, i32, i32
  }
  func.func @transform_1(%arg0: i32, %arg1: i32, %arg2: i32) -> (i32, i32, i32) {
    %c1_i32 = arith.constant 1 : i32
    %0 = arith.muli %arg1, %c1_i32 : i32
    %1 = arith.addi %0, %arg2 : i32
    %c0_i32 = arith.constant 0 : i32
    %2 = arith.minsi %1, %c0_i32 : i32
    %c0_i32_0 = arith.constant 0 : i32
    %c0_i32_1 = arith.constant 0 : i32
    return %arg0, %2, %c0_i32_0 : i32, i32, i32
  }
  func.func @transform_2(%arg0: i32, %arg1: i32, %arg2: i32) -> (i32, i32, i32, i32) {
    %c0_i32 = arith.constant 0 : i32
    %c0_i32_0 = arith.constant 0 : i32
    %c0_i32_1 = arith.constant 0 : i32
    return %arg0, %arg1, %c0_i32, %c0_i32_0 : i32, i32, i32, i32
  }
}

</mosaic_0001>

<llo_original>
// kernel: tpu_custom_call.1
$region0: #{tpu_custom_call.1}
  #allocation0 [shape = 'u32[]', space=smem, size = 0x4, offset = 0x4, fixed_abs, tag = 'smem constant byte address 0x4 - core index']
  #allocation1 [shape = 'u32[144,128]{1,0:T(1,128)}', space=vmem, size = 0x12000, scoped, tag = 'internal scratch']
  #allocation2 [shape = 'f32[4,2,128]{2,1,0:T(2,128)}', space=vmem, size = 0x1000, scoped, tag = 'scratch operand']
  #allocation3 [shape = 'f32[4,2,128]{2,1,0:T(2,128)}', space=vmem, size = 0x1000, scoped, tag = 'scratch operand']
  #allocation4 [shape = 'f32[4,2,128]{2,1,0:T(2,128)}', space=vmem, size = 0x1000, scoped, tag = 'scratch operand']
  %s0 = inlined_call_operand.hbm [shape: f32[2,4,2,128], index: 0, kind: input, shape index: {}]
  %s1 = inlined_call_operand.vmem [shape: s8[2,2,128], index: 1, kind: input, shape index: {}]
  %s2 = inlined_call_operand.vmem [shape: f32[2,1,4,3], index: 2, kind: output, shape index: {}]
  %s3 = sld [smem:[#allocation0]]
  $region53: #{tpu_custom_call.1} parent=0
    _
  %s5 = ssub.s32 1, %s3
  %s6 = scalar_select 0, %s5, %s3
  $region1: #{tpu_custom_call.1} parent=0
    #allocation5 [shape = 'u8[8192]{0}', space=vmem, size = 0x2000, scoped, tag = 'input window, operand 0']
    #allocation6 [shape = 's32[2]{0}', space=sflag, size = 0x8, scoped, tag = 'scoped memory for tpu_custom_call.1']
    %7 = vsyncpa [#allocation6], 0
    %s8 = scalar_lea.sflag [#allocation6], 1
    %9 = vsyncpa %s8, 0
    loop: start=0, step=1, limit=4
    $region2: #{tpu_custom_call.1} parent=1 // loop_pre_header
      _
    $region3: #{tpu_custom_call.1} parent=1 // loop_header
      %s11 = sphi 0, %s15
      %p12 = scmp.ge.s32.totalorder %s11, 4
      %s18 = sphi 0, %s37
      %s19 = sphi 0, %s33
      %s20 = sphi 0, %s29
      %s21 = sphi 0, %s18
      %s22 = sphi 0, %s19
      %s23 = sphi 0, %s20
      %s24 = sphi 0, %s21
      %s25 = sphi 0, %s22
      %s26 = sphi 0, %s23
      %s48 = sphi 0, %s50
      %s51 = sphi 0, %s48
      %s52 = sphi 0, %s51
      %s68 = sphi 0, %s52
      %s82 = sphi 0, %s84
      %s85 = sphi 0, %s82
      %s86 = sphi 0, %s85
      %s102 = sphi 0, %s86
      %s110 = sphi 0, %s112
      %s113 = sphi 0, %s110
      %s114 = sphi 0, %s113
      %s130 = sphi 0, %s114
    $region4: #{tpu_custom_call.1} parent=1 // loop_header_branch
      %14 = sbr.rel (%p12) target = $region8
    $region5: #{tpu_custom_call.1} parent=1 // loop_body
      %s16 = ssub.s32 %s11, 1
      %s17 = ssub.s32 %s11, 2
      %s27 = sadd.s32 1, %s20
      %p28 = scmp.ge.s32.totalorder %s27, 1
      %s29 = scalar_select %p28, 0, %s27
      %s30 = sadd.s32 1, %s19
      %s31 = scalar_select %p28, %s30, %s19
      %p32 = scmp.ge.s32.totalorder %s31, 1
      %s33 = scalar_select %p32, 0, %s31
      %s34 = sadd.s32 1, %s18
      %s35 = scalar_select %p32, %s34, %s18
      %p36 = scmp.ge.s32.totalorder %s35, 2
      %s37 = scalar_select %p36, 0, %s35
      %s38 = sadd.s32 %s19, %s20
      %p39 = scmp.lt.s32.totalorder %s38, 0
      %s40 = scalar_select %p39, %s38, 0
      %s41 = sadd.s32 %s33, %s29
      %p42 = scmp.lt.s32.totalorder %s41, 0
      %s43 = scalar_select %p42, %s41, 0
      %s44 = ssub.s32 %s18, %s37
      %s45 = ssub.s32 %s40, %s43
      %s46 = sor.u32 %s44, %s45
      %p47 = scmp.eq.s32.totalorder %s46, 0
      %s49 = sadd.s32 %s48, 1
      %s50 = scalar_select %p47, %s48, %s49
      %p53 = pneg %p47
      %p54 = scmp.eq.s32.totalorder %s11, 1
      %p55 = por %p53, %p54
      %p56 = scmp.ne.s32.totalorder %s48, %s51
      %p57 = scmp.eq.s32.totalorder %s11, 0
      %p58 = por %p56, %p57
      %p59 = scmp.ne.s32.totalorder %s48, %s51
      %p60 = scmp.eq.s32.totalorder %s16, 1
      %p61 = por %p59, %p60
      %p62 = scmp.ne.s32.totalorder %s51, %s52
      %p63 = scmp.eq.s32.totalorder %s16, 0
      %p64 = por %p62, %p63
      %p65 = scmp.ne.s32.totalorder %s51, %s52
      %p66 = scmp.eq.s32.totalorder %s17, 1
      %p67 = por %p65, %p66
      %p69 = scmp.ne.s32.totalorder %s52, %s68
      %p70 = scmp.eq.s32.totalorder %s17, 0
      %p71 = por %p69, %p70
      %s72 = sadd.s32 %s19, %s20
      %p73 = scmp.lt.s32.totalorder %s72, 0
      %s74 = scalar_select %p73, %s72, 0
      %s75 = sadd.s32 %s33, %s29
      %p76 = scmp.lt.s32.totalorder %s75, 0
      %s77 = scalar_select %p76, %s75, 0
      %s78 = ssub.s32 %s18, %s37
      %s79 = ssub.s32 %s74, %s77
      %s80 = sor.u32 %s78, %s79
      %p81 = scmp.eq.s32.totalorder %s80, 0
      %s83 = sadd.s32 %s82, 1
      %s84 = scalar_select %p81, %s82, %s83
      %p87 = pneg %p81
      %p88 = scmp.eq.s32.totalorder %s11, 1
      %p89 = por %p87, %p88
      %p90 = scmp.ne.s32.totalorder %s82, %s85
      %p91 = scmp.eq.s32.totalorder %s11, 0
      %p92 = por %p90, %p91
      %p93 = scmp.ne.s32.totalorder %s82, %s85
      %p94 = scmp.eq.s32.totalorder %s16, 1
      %p95 = por %p93, %p94
      %p96 = scmp.ne.s32.totalorder %s85, %s86
      %p97 = scmp.eq.s32.totalorder %s16, 0
      %p98 = por %p96, %p97
      %p99 = scmp.ne.s32.totalorder %s85, %s86
      %p100 = scmp.eq.s32.totalorder %s17, 1
      %p101 = por %p99, %p100
      %p103 = scmp.ne.s32.totalorder %s86, %s102
      %p104 = scmp.eq.s32.totalorder %s17, 0
      %p105 = por %p103, %p104
      %s106 = ssub.s32 %s18, %s37
      %s107 = ssub.s32 %s19, %s33
      %s108 = sor.u32 %s106, %s107
      %p109 = scmp.eq.s32.totalorder %s108, 0
      %s111 = sadd.s32 %s110, 1
      %s112 = scalar_select %p109, %s110, %s111
      %p115 = pneg %p109
      %p116 = scmp.eq.s32.totalorder %s11, 1
      %p117 = por %p115, %p116
      %p118 = scmp.ne.s32.totalorder %s110, %s113
      %p119 = scmp.eq.s32.totalorder %s11, 0
      %p120 = por %p118, %p119
      %p121 = scmp.ne.s32.totalorder %s110, %s113
      %p122 = scmp.eq.s32.totalorder %s16, 1
      %p123 = por %p121, %p122
      %p124 = scmp.ne.s32.totalorder %s113, %s114
      %p125 = scmp.eq.s32.totalorder %s16, 0
      %p126 = por %p124, %p125
      %p127 = scmp.ne.s32.totalorder %s113, %s114
      %p128 = scmp.eq.s32.totalorder %s17, 1
      %p129 = por %p127, %p128
      %p131 = scmp.ne.s32.totalorder %s114, %s130
      %p132 = scmp.eq.s32.totalorder %s17, 0
      %p133 = por %p131, %p132
      %p134 = scmp.le.s32.totalorder 1, %s11
      %p135 = scmp.lt.s32.totalorder %s11, 3
      %p136 = pnand %p134, %p135
      %p137 = pneg %p136
      // Predicated region
      $region9: #{tpu_custom_call.1} parent=5 // pred_check
        _
      $region10: #{tpu_custom_call.1} parent=5 // pred_check_branch
        %139 = sbr.rel (%p136) target = $region12
      $region11: #{tpu_custom_call.1} parent=5 // pred_region
        %s140 = ssub.s32 %s11, 1
      $region12: #{tpu_custom_call.1} parent=5 // pred_fallthru
        _
      %p141 = scmp.lt.s32.totalorder %s11, 2
      // Predicated region
      $region13: #{tpu_custom_call.1} parent=5 // pred_check
        %p142 = pneg %p141
      $region14: #{tpu_custom_call.1} parent=5 // pred_check_branch
        %144 = sbr.rel (%p142) target = $region16
      $region15: #{tpu_custom_call.1} parent=5 // pred_region
        // Predicated region
        $region17: #{tpu_custom_call.1} parent=15 // pred_check
          %p145 = pneg %p58
        $region18: #{tpu_custom_call.1} parent=15 // pred_check_branch
          %147 = sbr.rel (%p145) target = $region20
        $region19: #{tpu_custom_call.1} parent=15 // pred_region
          %s148 = sand.u32 %s48, 1
          %s149 = scalar_lea.sflag [#allocation6], %s148
          %s150 = sand.u32 %s48, 1
          %s151 = smul.addr %s150, 8
          %s152 = scalar_lea.vmem [#allocation5], %s151
          %s153 = sadd.s32 %s19, %s20
          %p154 = scmp.lt.s32.totalorder %s153, 0
          %s155 = scalar_select %p154, %s153, 0
          %s157 = ssub.s32 128, 128
          %158 = vsyncadd %s149, %s157
          %s159 = smul.addr %s18, 4
          %s160 = sadd.s32 %s155, %s159
          %s161 = smul.addr %s160, 32
          %s162 = scalar_lea.hbm %s0, %s161
          %s163 = sshll.u32 %s152, 4
          %s164 = int_to_ptr.vmem [resolvable:$true] %s163
          %169 = dma.hbm_to_vmem [thread:$0]  %s162, 128, %s164, %s149, 32, 32, 2
        $region20: #{tpu_custom_call.1} parent=15 // pred_fallthru
          _
        // Predicated region
        $region21: #{tpu_custom_call.1} parent=15 // pred_check
          %p170 = pneg %p92
        $region22: #{tpu_custom_call.1} parent=15 // pred_check_branch
          %172 = sbr.rel (%p170) target = $region24
        $region23: #{tpu_custom_call.1} parent=15 // pred_region
          %s173 = sadd.s32 %s19, %s20
          %p174 = scmp.lt.s32.totalorder %s173, 0
          %s175 = scalar_select %p174, %s173, 0
          %p176 = scmp.lt.s32.totalorder %s18, 1
          %s177 = scalar_select %p176, %s18, 1
          %p178 = scmp.lt.s32.totalorder %s175, 0
          %s179 = scalar_select %p178, %s175, 0
          %s180 = sadd.s32 %s179, %s177
          %s181 = scalar_lea.vmem %s1, %s180
          %s182 = sadd.s32 %s19, %s20
          %p183 = scmp.lt.s32.totalorder %s182, 0
          %s184 = scalar_select %p183, %s182, 0
        $region24: #{tpu_custom_call.1} parent=15 // pred_fallthru
          _
      $region16: #{tpu_custom_call.1} parent=5 // pred_fallthru
        _
      %p185 = scmp.le.s32.totalorder 1, %s11
      %p186 = scmp.lt.s32.totalorder %s11, 3
      %p187 = pnand %p185, %p186
      %p188 = pneg %p187
      // Predicated region
      $region25: #{tpu_custom_call.1} parent=5 // pred_check
        _
      $region26: #{tpu_custom_call.1} parent=5 // pred_check_branch
        %190 = sbr.rel (%p187) target = $region28
      $region27: #{tpu_custom_call.1} parent=5 // pred_region
        %s191 = ssub.s32 %s11, 1
        %s192 = sand.u32 %s51, 1
        %s193 = scalar_lea.sflag [#allocation6], %s192
        %s194 = sand.u32 %s51, 1
        %s195 = smul.addr %s194, 8
        %s196 = scalar_lea.vmem [#allocation5], %s195
        // Predicated region
        $region29: #{tpu_custom_call.1} parent=27 // pred_check
          %p197 = pneg %p64
        $region30: #{tpu_custom_call.1} parent=27 // pred_check_branch
          %199 = sbr.rel (%p197) target = $region32
        $region31: #{tpu_custom_call.1} parent=27 // pred_region
          %200 = dma.done %s193, 128
        $region32: #{tpu_custom_call.1} parent=27 // pred_fallthru
          _
        %s201 = sand.u32 %s51, 1
        %s202 = scalar_lea.sflag [#allocation6], %s201
        %s203 = sand.u32 %s51, 1
        %s204 = smul.addr %s203, 8
        %s205 = scalar_lea.vmem [#allocation5], %s204
        %p206 = pneg %p64
        %p207 = pneg %p61
        %s208 = sadd.s32 %s22, %s23
        %p209 = scmp.lt.s32.totalorder %s208, 0
        %s210 = scalar_select %p209, %s208, 0
        %p211 = scmp.lt.s32.totalorder %s21, 1
        %s212 = scalar_select %p211, %s21, 1
        %p213 = scmp.lt.s32.totalorder %s210, 0
        %s214 = scalar_select %p213, %s210, 0
        %s215 = sadd.s32 %s214, %s212
        %s216 = scalar_lea.vmem %s1, %s215
        %p217 = pneg %p98
        %p218 = pneg %p95
        %p219 = pneg %p126
        %p220 = pneg %p123
        %p221 = scmp.lt.s32.totalorder %s21, 1
        %s222 = scalar_select %p221, %s21, 1
        %p223 = scmp.lt.s32.totalorder %s22, 0
        %s224 = scalar_select %p223, %s22, 0
        %s225 = sadd.s32 %s224, %s222
        %s226 = smul.addr %s225, 4
        %s227 = scalar_lea.vmem %s2, %s226
        %s228 = sadd.s32 %s22, %s23
        %p229 = scmp.lt.s32.totalorder %s228, 0
        %s230 = scalar_select %p229, %s228, 0
        %s231 = sadd.s32 %s22, %s23
        %p232 = scmp.lt.s32.totalorder %s231, 0
        %s233 = scalar_select %p232, %s231, 0
        %p234 = scmp.lt.s32.totalorder %s21, 1
        %s235 = scalar_select %p234, %s21, 1
        %p236 = scmp.lt.s32.totalorder %s233, 0
        %s237 = scalar_select %p236, %s233, 0
        %s238 = sadd.s32 %s237, %s235
        %s239 = scalar_lea.vmem %s1, %s238
        %s240 = sadd.s32 %s22, %s23
        %p241 = scmp.lt.s32.totalorder %s240, 0
        %s242 = scalar_select %p241, %s240, 0
        %p243 = scmp.lt.s32.totalorder %s21, 1
        %s244 = scalar_select %p243, %s21, 1
        %p245 = scmp.lt.s32.totalorder %s22, 0
        %s246 = scalar_select %p245, %s22, 0
        %s247 = sadd.s32 %s246, %s244
        %s248 = smul.addr %s247, 4
        %s249 = scalar_lea.vmem %s2, %s248
        %p250 = scmp.eq.s32.totalorder %s23, 0
        // Predicated region
        $region33: #{tpu_custom_call.1} parent=27 // pred_check
          %p251 = pneg %p250
        $region34: #{tpu_custom_call.1} parent=27 // pred_check_branch
          %253 = sbr.rel (%p251) target = $region36
        $region35: #{tpu_custom_call.1} parent=27 // pred_region
          %254 = vst [vmem:[#allocation2] sm:$0x3] 0.0
          %255 = vst [vmem:[#allocation2 + $0x2] sm:$0x3] 0.0
          %256 = vst [vmem:[#allocation2 + $0x4] sm:$0x3] 0.0
          %257 = vst [vmem:[#allocation2 + $0x6] sm:$0x3] 0.0
          %258 = vst [vmem:[#allocation3] sm:$0x3] 0.0
          %259 = vst [vmem:[#allocation3 + $0x2] sm:$0x3] 0.0
          %260 = vst [vmem:[#allocation3 + $0x4] sm:$0x3] 0.0
          %261 = vst [vmem:[#allocation3 + $0x6] sm:$0x3] 0.0
          %262 = vst [vmem:[#allocation4] sm:$0x3] 0.0
          %263 = vst [vmem:[#allocation4 + $0x2] sm:$0x3] 0.0
          %264 = vst [vmem:[#allocation4 + $0x4] sm:$0x3] 0.0
          %265 = vst [vmem:[#allocation4 + $0x6] sm:$0x3] 0.0
        $region36: #{tpu_custom_call.1} parent=27 // pred_fallthru
          _
        %v266 = vld [vmem:[%s196] sm:$0x3]
        %v267 = vld [vmem:[%s196 + $0x2] sm:$0x3]
        %v268 = vld [vmem:[%s196 + $0x4] sm:$0x3]
        %v269 = vld [vmem:[%s196 + $0x6] sm:$0x3]
        %v270 = vld [vmem:[%s239] sm:$0x1]
        %v271 = vunpack.c.0.s8 %v270
        %vm272 = vcmask 1041408
        %v273 = vsel %vm272, %v266, -inf
        %v274 = vsel %vm272, %v267, -inf
        %v275 = vsel %vm272, %v268, -inf
        %v276 = vsel %vm272, %v269, -inf
        %v277 = vmax.f32 %v273, %v274
        %v278 = vmax.f32 %v275, %v276
        %v279 = vmax.f32 %v277, %v278
        %v280 = vsub.f32 %v266, %v279
        %v281 = vsub.f32 %v267, %v279
        %v282 = vsub.f32 %v268, %v279
        %v283 = vsub.f32 %v269, %v279
        %v284 = vmul.f32 %v280, 1.442695
        %v285 = vpow.pop %v284
        %v286 = vmul.f32 %v281, 1.442695
        %v287 = vpow.pop %v286
        %v288 = vmul.f32 %v282, 1.442695
        %v289 = vpow.pop %v288
        %v290 = vmul.f32 %v283, 1.442695
        %v291 = vpow.pop %v290
        %v292 = vsel %vm272, %v285, 0.0
        %v293 = vsel %vm272, %v287, 0.0
        %v294 = vadd.f32 %v292, %v293
        %v295 = vsel %vm272, %v289, 0.0
        %v296 = vadd.f32 %v294, %v295
        %v297 = vsel %vm272, %v291, 0.0
        %v298 = vadd.f32 %v296, %v297
        %v299 = vrcp.pop %v298
        %v300 = vmul.f32 %v285, %v299
        %v301 = vmul.f32 %v287, %v299
        %v302 = vmul.f32 %v289, %v299
        %v303 = vmul.f32 %v291, %v299
        %vm304 = vcmp.eq.s32.totalorder %v271, 0
        %vm305 = vcmp.eq.s32.totalorder %v271, 1
        %vm306 = vcmp.eq.s32.totalorder %v271, 2
        %vm307 = vcmp.eq.s32.totalorder %v271, 3
        %v308 = vld [vmem:[#allocation2] sm:$0x3]
        %v309 = vld [vmem:[#allocation2 + $0x2] sm:$0x3]
        %v310 = vld [vmem:[#allocation2 + $0x4] sm:$0x3]
        %v311 = vld [vmem:[#allocation2 + $0x6] sm:$0x3]
        %v312 = vmul.f32 %v300, %v300
        %v313 = vmul.f32 %v301, %v301
        %v314 = vmul.f32 %v302, %v302
        %v315 = vmul.f32 %v303, %v303
        %v316 = vadd.f32 %v308, %v312
        %v317 = vadd.f32 %v309, %v313
        %v318 = vadd.f32 %v310, %v314
        %v319 = vadd.f32 %v311, %v315
        %320 = vst [vmem:[#allocation2] sm:$0x3] %v316
        %321 = vst [vmem:[#allocation2 + $0x2] sm:$0x3] %v317
        %322 = vst [vmem:[#allocation2 + $0x4] sm:$0x3] %v318
        %323 = vst [vmem:[#allocation2 + $0x6] sm:$0x3] %v319
        %v324 = vld [vmem:[#allocation3] sm:$0x3]
        %v325 = vld [vmem:[#allocation3 + $0x2] sm:$0x3]
        %v326 = vld [vmem:[#allocation3 + $0x4] sm:$0x3]
        %v327 = vld [vmem:[#allocation3 + $0x6] sm:$0x3]
        %v328 = vsel %vm304, %v300, 0.0
        %v329 = vsel %vm305, %v301, 0.0
        %v330 = vsel %vm306, %v302, 0.0
        %v331 = vsel %vm307, %v303, 0.0
        %v332 = vadd.f32 %v324, %v328
        %v333 = vadd.f32 %v325, %v329
        %v334 = vadd.f32 %v326, %v330
        %v335 = vadd.f32 %v327, %v331
        %336 = vst [vmem:[#allocation3] sm:$0x3] %v332
        %337 = vst [vmem:[#allocation3 + $0x2] sm:$0x3] %v333
        %338 = vst [vmem:[#allocation3 + $0x4] sm:$0x3] %v334
        %339 = vst [vmem:[#allocation3 + $0x6] sm:$0x3] %v335
        %v340 = vld [vmem:[#allocation4] sm:$0x3]
        %v341 = vld [vmem:[#allocation4 + $0x2] sm:$0x3]
        %v342 = vld [vmem:[#allocation4 + $0x4] sm:$0x3]
        %v343 = vld [vmem:[#allocation4 + $0x6] sm:$0x3]
        %v344 = vsel %vm304, 1.0, 0.0
        %v345 = vsel %vm305, 1.0, 0.0
        %v346 = vsel %vm306, 1.0, 0.0
        %v347 = vsel %vm307, 1.0, 0.0
        %v348 = vadd.f32 %v340, %v344
        %v349 = vadd.f32 %v341, %v345
        %v350 = vadd.f32 %v342, %v346
        %v351 = vadd.f32 %v343, %v347
        %352 = vst [vmem:[#allocation4] sm:$0x3] %v348
        %353 = vst [vmem:[#allocation4 + $0x2] sm:$0x3] %v349
        %354 = vst [vmem:[#allocation4 + $0x4] sm:$0x3] %v350
        %355 = vst [vmem:[#allocation4 + $0x6] sm:$0x3] %v351
        // Predicated region
        $region37: #{tpu_custom_call.1} parent=27 // pred_check
          %p356 = pneg %p250
        $region38: #{tpu_custom_call.1} parent=27 // pred_check_branch
          %358 = sbr.rel (%p356) target = $region40
        $region39: #{tpu_custom_call.1} parent=27 // pred_region
          %v359 = vld [vmem:[#allocation2] sm:$0x3]
          %v360 = vld [vmem:[#allocation2 + $0x2] sm:$0x3]
          %v361 = vld [vmem:[#allocation2 + $0x4] sm:$0x3]
          %v362 = vld [vmem:[#allocation2 + $0x6] sm:$0x3]
          %v363 = vsel %vm272, %v359, 0.0
          %364 = vadd.xlane.f32.xlu0 %v363
          %v365 = vpop.xlane.xlu0 %364
          %v366 = vsel %vm272, %v360, 0.0
          %367 = vadd.xlane.f32.xlu0 %v366
          %v368 = vpop.xlane.xlu0 %367
          %v369 = vsel %vm272, %v361, 0.0
          %370 = vadd.xlane.f32.xlu0 %v369
          %v371 = vpop.xlane.xlu0 %370
          %v372 = vsel %vm272, %v362, 0.0
          %373 = vadd.xlane.f32.xlu0 %v372
          %v374 = vpop.xlane.xlu0 %373
          %v379 = vlaneseq
          %v380 = vand.u32 %v379, 127
          %v381 = vlaneseq
          %v382 = vshrl.u32 %v381, 7
          %v383 = vsub.s32 %v380, %v382
          %v384 = vrot.slane %v365, %v383
          %v385 = vlaneseq
          %v386 = vshrl.u32 %v385, 7
          %v387 = vsub.s32 %v380, %v386
          %v388 = vrot.slane %v368, %v387
          %v389 = vlaneseq
          %v390 = vshrl.u32 %v389, 7
          %v391 = vsub.s32 %v380, %v390
          %v392 = vrot.slane %v371, %v391
          %v393 = vlaneseq
          %v394 = vshrl.u32 %v393, 7
          %v395 = vsub.s32 %v380, %v394
          %v396 = vrot.slane %v374, %v395
          %vm397 = vcmask 1041409
          %v398 = vsel %vm397, %v388, %v384
          %vm399 = vcmask 1042434
          %v400 = vsel %vm399, %v392, %v398
          %vm401 = vcmask 1043459
          %v402 = vsel %vm401, %v396, %v400
          %vm404 = vcmask 11264
          %v405 = vsel %vm404, %v402, 0.0
          %406 = vadd.xlane.f32.xlu0 %v405
          %v407 = vpop.xlane.xlu0 %406
          %vm408 = vcmask 3072
          %409 = vst.msk [vmem:[%s249] sm:$0xf] %vm408, %v407
          %v410 = vld [vmem:[#allocation3] sm:$0x3]
          %v411 = vld [vmem:[#allocation3 + $0x2] sm:$0x3]
          %v412 = vld [vmem:[#allocation3 + $0x4] sm:$0x3]
          %v413 = vld [vmem:[#allocation3 + $0x6] sm:$0x3]
          %v414 = vsel %vm272, %v410, 0.0
          %415 = vadd.xlane.f32.xlu0 %v414
          %v416 = vpop.xlane.xlu0 %415
          %v417 = vsel %vm272, %v411, 0.0
          %418 = vadd.xlane.f32.xlu0 %v417
          %v419 = vpop.xlane.xlu0 %418
          %v420 = vsel %vm272, %v412, 0.0
          %421 = vadd.xlane.f32.xlu0 %v420
          %v422 = vpop.xlane.xlu0 %421
          %v423 = vsel %vm272, %v413, 0.0
          %424 = vadd.xlane.f32.xlu0 %v423
          %v425 = vpop.xlane.xlu0 %424
          %v430 = vlaneseq
          %v431 = vshrl.u32 %v430, 7
          %v432 = vsub.s32 %v380, %v431
          %v433 = vrot.slane %v416, %v432
          %v434 = vlaneseq
          %v435 = vshrl.u32 %v434, 7
          %v436 = vsub.s32 %v380, %v435
          %v437 = vrot.slane %v419, %v436
          %v438 = vlaneseq
          %v439 = vshrl.u32 %v438, 7
          %v440 = vsub.s32 %v380, %v439
          %v441 = vrot.slane %v422, %v440
          %v442 = vlaneseq
          %v443 = vshrl.u32 %v442, 7
          %v444 = vsub.s32 %v380, %v443
          %v445 = vrot.slane %v425, %v444
          %v446 = vsel %vm397, %v437, %v433
          %v447 = vsel %vm399, %v441, %v446
          %v448 = vsel %vm401, %v445, %v447
          %v450 = vsel %vm404, %v448, 0.0
          %451 = vadd.xlane.f32.xlu0 %v450
          %v452 = vpop.xlane.xlu0 %451
          %vm453 = vcmask 11272
          %454 = vst.msk [vmem:[%s249] sm:$0xf] %vm453, %v452
          %v455 = vld [vmem:[#allocation4] sm:$0x3]
          %v456 = vld [vmem:[#allocation4 + $0x2] sm:$0x3]
          %v457 = vld [vmem:[#allocation4 + $0x4] sm:$0x3]
          %v458 = vld [vmem:[#allocation4 + $0x6] sm:$0x3]
          %v459 = vsel %vm272, %v455, 0.0
          %460 = vadd.xlane.f32.xlu0 %v459
          %v461 = vpop.xlane.xlu0 %460
          %v462 = vsel %vm272, %v456, 0.0
          %463 = vadd.xlane.f32.xlu0 %v462
          %v464 = vpop.xlane.xlu0 %463
          %v465 = vsel %vm272, %v457, 0.0
          %466 = vadd.xlane.f32.xlu0 %v465
          %v467 = vpop.xlane.xlu0 %466
          %v468 = vsel %vm272, %v458, 0.0
          %469 = vadd.xlane.f32.xlu0 %v468
          %v470 = vpop.xlane.xlu0 %469
          %v475 = vlaneseq
          %v476 = vshrl.u32 %v475, 7
          %v477 = vsub.s32 %v380, %v476
          %v478 = vrot.slane %v461, %v477
          %v479 = vlaneseq
          %v480 = vshrl.u32 %v479, 7
          %v481 = vsub.s32 %v380, %v480
          %v482 = vrot.slane %v464, %v481
          %v483 = vlaneseq
          %v484 = vshrl.u32 %v483, 7
          %v485 = vsub.s32 %v380, %v484
          %v486 = vrot.slane %v467, %v485
          %v487 = vlaneseq
          %v488 = vshrl.u32 %v487, 7
          %v489 = vsub.s32 %v380, %v488
          %v490 = vrot.slane %v470, %v489
          %v491 = vsel %vm397, %v482, %v478
          %v492 = vsel %vm399, %v486, %v491
          %v493 = vsel %vm401, %v490, %v492
          %v495 = vsel %vm404, %v493, 0.0
          %496 = vadd.xlane.f32.xlu0 %v495
          %v497 = vpop.xlane.xlu0 %496
          %vm498 = vcmask 19472
          %499 = vst.msk [vmem:[%s249] sm:$0xf] %vm498, %v497
        $region40: #{tpu_custom_call.1} parent=27 // pred_fallthru
          _
        %p500 = scmp.lt.s32.totalorder %s21, 1
        %s501 = scalar_select %p500, %s21, 1
        %p502 = scmp.lt.s32.totalorder %s22, 0
        %s503 = scalar_select %p502, %s22, 0
        %s504 = sadd.s32 %s503, %s501
        %s505 = smul.addr %s504, 4
        %s506 = scalar_lea.vmem %s2, %s505
        // Predicated region
        $region41: #{tpu_custom_call.1} parent=27 // pred_check
          %p507 = pneg %p123
        $region42: #{tpu_custom_call.1} parent=27 // pred_check_branch
          %509 = sbr.rel (%p507) target = $region44
        $region43: #{tpu_custom_call.1} parent=27 // pred_region
          _
        $region44: #{tpu_custom_call.1} parent=27 // pred_fallthru
          _
      $region28: #{tpu_custom_call.1} parent=5 // pred_fallthru
        _
      %p510 = scmp.le.s32.totalorder 2, %s11
      // Predicated region
      $region45: #{tpu_custom_call.1} parent=5 // pred_check
        %p511 = pneg %p510
      $region46: #{tpu_custom_call.1} parent=5 // pred_check_branch
        %513 = sbr.rel (%p511) target = $region48
      $region47: #{tpu_custom_call.1} parent=5 // pred_region
        %s514 = ssub.s32 %s11, 2
        // Predicated region
        $region49: #{tpu_custom_call.1} parent=47 // pred_check
          %p515 = pneg %p129
        $region50: #{tpu_custom_call.1} parent=47 // pred_check_branch
          %517 = sbr.rel (%p515) target = $region52
        $region51: #{tpu_custom_call.1} parent=47 // pred_region
          %p518 = scmp.lt.s32.totalorder %s24, 1
          %s519 = scalar_select %p518, %s24, 1
          %p520 = scmp.lt.s32.totalorder %s25, 0
          %s521 = scalar_select %p520, %s25, 0
          %s522 = sadd.s32 %s521, %s519
          %s523 = smul.addr %s522, 4
          %s524 = scalar_lea.vmem %s2, %s523
        $region52: #{tpu_custom_call.1} parent=47 // pred_fallthru
          _
      $region48: #{tpu_custom_call.1} parent=5 // pred_fallthru
        _
    $region6: #{tpu_custom_call.1} parent=1 // loop_footer
      %s15 = sadd.s32 1, %s11
    $region7: #{tpu_custom_call.1} parent=1 // loop_footer_branch
      %10 = sbr.rel target = $region3
    $region8: #{tpu_custom_call.1} parent=1 // loop_exit
      _
    %525 = vsyncpa [#allocation6], 1
    %s526 = scalar_lea.sflag [#allocation6], 1
    %527 = vsyncpa %s526, 1

</llo_original>
